<compile_context>
chip_gen: v6e
topology: v6e:2x2x1
jax: 0.10.0
libtpu: 0.0.40
codegen_flags: <defaults>
</compile_context>

<pallas_src>
import jax
import jax.numpy as jnp
from jax.experimental import pallas as pl
from jax.experimental.pallas import tpu as pltpu

# Problem sizes (small, consistent with the module's forward semantics).
C, H, W = 8, 16, 128          # C = number of classes / conv in_channels
KH = KW = 3                   # conv = nn.Conv2d(C, 1, kernel_size=3, padding=1)
GRANULARITY = 100 / 10.0      # CombinedLoss(granularity=100) -> self.granularity = 10.0


def combined_loss_kernel(x_ref, gt_ref, w_ref, b_ref, out_ref):
    # x_ref:   [C, H, W]   f32 VMEM  (logits, batch squeezed; W == 128 lanes)
    # gt_ref:  [H, W]      f32 VMEM  (raw ground truth, pre-scaling)
    # w_ref:   [C*KH*KW]   f32 SMEM  (conv weight, flattened from [1, C, 3, 3])
    # b_ref:   [1]         f32 SMEM  (conv bias)
    # out_ref: [1]         f32 SMEM  (loss1 + 0.1 * loss2)
    gt = gt_ref[...] * GRANULARITY              # gt = gt * self.granularity
    tgt = gt.astype(jnp.int32)                  # .type(LongTensor): truncation toward zero

    # ---- pass 1: running max over classes (numerically stable logsumexp) ----
    m = x_ref[0]
    for c in range(1, C):
        m = jnp.maximum(m, x_ref[c])

    zeros = jnp.zeros((H, W), jnp.float32)
    sum_exp = zeros                              # softmax denominator accumulator
    x_tgt = zeros                                # gathered logit x[tgt]
    # 9 per-tap conv accumulators: acc[dy][dx] = sum_c W[c,dy,dx] * x[c]   (unshifted)
    acc = [[zeros for _ in range(KW)] for _ in range(KH)]

    # ---- pass 2: fused per-class loop — pure VPU mul/add + one EUP exp per plane ----
    for c in range(C):
        xc = x_ref[c]

        # (a) logsumexp accumulation (EUP exp overlaps with the VPU FMAs below).
        sum_exp = sum_exp + jnp.exp(xc - m)

        # (b) target gather: x[tgt] via per-class scalar compare (no [C,H,W] iota).
        x_tgt = x_tgt + jnp.where(tgt == c, xc, 0.0)

        # (c) conv: 9 scalar-weighted FMAs into the per-tap accumulators.
        base = c * KH * KW
        for dy in range(KH):
            for dx in range(KW):
                acc[dy][dx] = acc[dy][dx] + w_ref[base + dy * KW + dx] * xc

    # ---- apply the 3x3 'same'-conv shifts/masks ONCE (linearity: roll(sum) == sum(roll)) ----
    # est[h, w] = sum_{dy,dx} shift_{dy,dx}(acc[dy][dx])[h, w]  with zero padding outside.
    row = jax.lax.broadcasted_iota(jnp.int32, (H, W), 0)
    col = jax.lax.broadcasted_iota(jnp.int32, (H, W), 1)
    top_ok = row >= 1          # valid outputs for source shift oy = -1 (dy = 0)
    bot_ok = row <= H - 2      # valid outputs for source shift oy = +1 (dy = 2)
    lft_ok = col >= 1          # valid outputs for source shift ox = -1 (dx = 0)
    rgt_ok = col <= W - 2      # valid outputs for source shift ox = +1 (dx = 2)

    def col_shift(a, dx):
        if dx == 0:
            return jnp.where(lft_ok, pltpu.roll(a, shift=1, axis=1), 0.0)
        if dx == 1:
            return a
        return jnp.where(rgt_ok, pltpu.roll(a, shift=W - 1, axis=1), 0.0)

    def row_shift(a, dy):
        if dy == 0:
            return jnp.where(top_ok, pltpu.roll(a, shift=1, axis=0), 0.0)
        if dy == 1:
            return a
        return jnp.where(bot_ok, pltpu.roll(a, shift=H - 1, axis=0), 0.0)

    est = zeros
    for dy in range(KH):
        row_sum = col_shift(acc[dy][0], 0) + acc[dy][1] + col_shift(acc[dy][2], 2)
        est = est + row_shift(row_sum, dy)

    # ---- fused reduction: loss1 + 0.1*loss2 = mean(ce_map + 0.1*sq_err_map) ----
    lse = m + jnp.log(sum_exp)                   # logsumexp over classes, per pixel
    err = (est + b_ref[0]) - gt                  # conv bias added as a scalar here
    per_pixel = (lse - x_tgt) + 0.1 * err * err
    inv_hw = 1.0 / (H * W)
    # TODO(synk): writer.add_scalar(...) / .item() TensorBoard logging has no Pallas equivalent.
    out_ref[0] = jnp.sum(per_pixel) * inv_hw


def combined_loss(x, gt, w, b):
    """x: [1, C, H, W] f32, gt: [1, 1, H, W] f32, w: [1, C, 3, 3] f32, b: [1] f32."""
    x3 = x[0]                                    # [C, H, W]
    gt2 = gt[0, 0]                               # [H, W]
    w_flat = w.reshape(-1)                       # [C*3*3]

    cost = pl.CostEstimate(
        flops=2 * C * KH * KW * H * W + 3 * C * H * W,   # conv FMAs + CE adds/maxes
        transcendentals=C * H * W,                        # exp per class-plane pixel
        bytes_accessed=(C * H * W + H * W + C * KH * KW + 2) * 4,
    )

    out = pl.pallas_call(
        combined_loss_kernel,
        out_shape=jax.ShapeDtypeStruct((1,), jnp.float32),
        in_specs=[
            pl.BlockSpec(memory_space=pltpu.MemorySpace.VMEM),   # x   [C,H,W]
            pl.BlockSpec(memory_space=pltpu.MemorySpace.VMEM),   # gt  [H,W]
            pl.BlockSpec(memory_space=pltpu.MemorySpace.SMEM),   # conv weight (flat)
            pl.BlockSpec(memory_space=pltpu.MemorySpace.SMEM),   # conv bias
        ],
        out_specs=pl.BlockSpec(memory_space=pltpu.MemorySpace.SMEM),
        cost_estimate=cost,
    )(x3, gt2, w_flat, b)
    return out[0]


def reference(x, gt, w, b):
    """Pure-JAX reference matching the PyTorch forward."""
    gt_s = gt * GRANULARITY
    tgt = gt_s[0].astype(jnp.int32)                              # [1, H, W]
    lse = jax.scipy.special.logsumexp(x, axis=1)                 # [1, H, W]
    x_t = jnp.take_along_axis(x, tgt[:, None, :, :], axis=1)[:, 0]
    loss1 = jnp.mean(lse - x_t)
    est = jax.lax.conv_general_dilated(
        x, w, window_strides=(1, 1), padding='SAME',
        dimension_numbers=('NCHW', 'OIHW', 'NCHW')) + b[0]
    loss2 = jnp.mean((est - gt_s) ** 2)
    return loss1 + 0.1 * loss2


if __name__ == "__main__":
    key = jax.random.PRNGKey(0)
    kx, kg, kw, kb = jax.random.split(key, 4)
    # Logits.
    x = jax.random.normal(kx, (1, C, H, W), dtype=jnp.float32)
    # Continuous ground truth; gt * granularity yields valid class indices in [0, C).
    gt = jax.random.uniform(kg, (1, 1, H, W), dtype=jnp.float32,
                            minval=0.0, maxval=(C - 1) / GRANULARITY)
    # Deterministic synthetic conv parameters (nn.Conv2d(C, 1, 3, padding=1) shapes).
    w = 0.1 * jax.random.normal(kw, (1, C, KH, KW), dtype=jnp.float32)
    b = 0.1 * jax.random.normal(kb, (1,), dtype=jnp.float32)

    out = combined_loss(x, gt, w, b)
    out = jax.block_until_ready(out)

    ref = reference(x, gt, w, b)
    assert jnp.allclose(out, ref, rtol=1e-4, atol=1e-4), (float(out), float(ref))
    print("KERNEL_OK")
</pallas_src>

<mosaic_0001>
module attributes {stable_mosaic.version = 11 : i64} {
  func.func @combined_loss_kernel(%arg0: memref<8x16x128xf32, #tpu.memory_space<vmem>>, %arg1: memref<16x128xf32, #tpu.memory_space<vmem>>, %arg2: memref<72xf32, #tpu.memory_space<smem>>, %arg3: memref<1xf32, #tpu.memory_space<smem>>, %arg4: memref<1xf32, #tpu.memory_space<smem>>) attributes {dimension_semantics = [], scalar_prefetch = 0 : i64, scratch_operands = 0 : i64, tpu.core_type = #tpu.core_type<tc>} {
    %c0 = arith.constant 0 : index
    %c0_0 = arith.constant 0 : index
    %0 = vector.load %arg1[%c0, %c0_0] : memref<16x128xf32, #tpu.memory_space<vmem>>, vector<16x128xf32>
    %cst = arith.constant 1.000000e+01 : f32
    %1 = vector.broadcast %cst : f32 to vector<16x128xf32>
    %2 = arith.mulf %0, %1 : vector<16x128xf32>
    %3 = arith.fptosi %2 : vector<16x128xf32> to vector<16x128xi32>
    %c0_1 = arith.constant 0 : index
    %c0_2 = arith.constant 0 : index
    %c0_3 = arith.constant 0 : index
    %4 = vector.load %arg0[%c0_1, %c0_2, %c0_3] : memref<8x16x128xf32, #tpu.memory_space<vmem>>, vector<1x16x128xf32>
    %5 = vector.shape_cast %4 : vector<1x16x128xf32> to vector<16x128xf32>
    %c1 = arith.constant 1 : index
    %c0_4 = arith.constant 0 : index
    %c0_5 = arith.constant 0 : index
    %6 = vector.load %arg0[%c1, %c0_4, %c0_5] : memref<8x16x128xf32, #tpu.memory_space<vmem>>, vector<1x16x128xf32>
    %7 = vector.shape_cast %6 : vector<1x16x128xf32> to vector<16x128xf32>
    %8 = arith.maximumf %5, %7 : vector<16x128xf32>
    %c2 = arith.constant 2 : index
    %c0_6 = arith.constant 0 : index
    %c0_7 = arith.constant 0 : index
    %9 = vector.load %arg0[%c2, %c0_6, %c0_7] : memref<8x16x128xf32, #tpu.memory_space<vmem>>, vector<1x16x128xf32>
    %10 = vector.shape_cast %9 : vector<1x16x128xf32> to vector<16x128xf32>
    %11 = arith.maximumf %8, %10 : vector<16x128xf32>
    %c3 = arith.constant 3 : index
    %c0_8 = arith.constant 0 : index
    %c0_9 = arith.constant 0 : index
    %12 = vector.load %arg0[%c3, %c0_8, %c0_9] : memref<8x16x128xf32, #tpu.memory_space<vmem>>, vector<1x16x128xf32>
    %13 = vector.shape_cast %12 : vector<1x16x128xf32> to vector<16x128xf32>
    %14 = arith.maximumf %11, %13 : vector<16x128xf32>
    %c4 = arith.constant 4 : index
    %c0_10 = arith.constant 0 : index
    %c0_11 = arith.constant 0 : index
    %15 = vector.load %arg0[%c4, %c0_10, %c0_11] : memref<8x16x128xf32, #tpu.memory_space<vmem>>, vector<1x16x128xf32>
    %16 = vector.shape_cast %15 : vector<1x16x128xf32> to vector<16x128xf32>
    %17 = arith.maximumf %14, %16 : vector<16x128xf32>
    %c5 = arith.constant 5 : index
    %c0_12 = arith.constant 0 : index
    %c0_13 = arith.constant 0 : index
    %18 = vector.load %arg0[%c5, %c0_12, %c0_13] : memref<8x16x128xf32, #tpu.memory_space<vmem>>, vector<1x16x128xf32>
    %19 = vector.shape_cast %18 : vector<1x16x128xf32> to vector<16x128xf32>
    %20 = arith.maximumf %17, %19 : vector<16x128xf32>
    %c6 = arith.constant 6 : index
    %c0_14 = arith.constant 0 : index
    %c0_15 = arith.constant 0 : index
    %21 = vector.load %arg0[%c6, %c0_14, %c0_15] : memref<8x16x128xf32, #tpu.memory_space<vmem>>, vector<1x16x128xf32>
    %22 = vector.shape_cast %21 : vector<1x16x128xf32> to vector<16x128xf32>
    %23 = arith.maximumf %20, %22 : vector<16x128xf32>
    %c7 = arith.constant 7 : index
    %c0_16 = arith.constant 0 : index
    %c0_17 = arith.constant 0 : index
    %24 = vector.load %arg0[%c7, %c0_16, %c0_17] : memref<8x16x128xf32, #tpu.memory_space<vmem>>, vector<1x16x128xf32>
    %25 = vector.shape_cast %24 : vector<1x16x128xf32> to vector<16x128xf32>
    %26 = arith.maximumf %23, %25 : vector<16x128xf32>
    %cst_18 = arith.constant 0.000000e+00 : f32
    %27 = vector.broadcast %cst_18 : f32 to vector<16x128xf32>
    %c0_19 = arith.constant 0 : index
    %c0_20 = arith.constant 0 : index
    %c0_21 = arith.constant 0 : index
    %28 = vector.load %arg0[%c0_19, %c0_20, %c0_21] : memref<8x16x128xf32, #tpu.memory_space<vmem>>, vector<1x16x128xf32>
    %29 = vector.shape_cast %28 : vector<1x16x128xf32> to vector<16x128xf32>
    %30 = arith.subf %29, %26 : vector<16x128xf32>
    %31 = math.exp %30 : vector<16x128xf32>
    %32 = arith.addf %27, %31 : vector<16x128xf32>
    %c0_i32 = arith.constant 0 : i32
    %33 = vector.broadcast %c0_i32 : i32 to vector<16x128xi32>
    %34 = arith.cmpi eq, %3, %33 : vector<16x128xi32>
    %cst_22 = arith.constant 0.000000e+00 : f32
    %35 = vector.broadcast %cst_22 : f32 to vector<16x128xf32>
    %36 = arith.select %34, %29, %35 : vector<16x128xi1>, vector<16x128xf32>
    %37 = arith.addf %27, %36 : vector<16x128xf32>
    %c0_23 = arith.constant 0 : index
    %38 = memref.load %arg2[%c0_23] : memref<72xf32, #tpu.memory_space<smem>>
    %39 = vector.broadcast %38 : f32 to vector<16x128xf32>
    %40 = arith.mulf %39, %29 : vector<16x128xf32>
    %41 = arith.addf %27, %40 : vector<16x128xf32>
    %c1_24 = arith.constant 1 : index
    %42 = memref.load %arg2[%c1_24] : memref<72xf32, #tpu.memory_space<smem>>
    %43 = vector.broadcast %42 : f32 to vector<16x128xf32>
    %44 = arith.mulf %43, %29 : vector<16x128xf32>
    %45 = arith.addf %27, %44 : vector<16x128xf32>
    %c2_25 = arith.constant 2 : index
    %46 = memref.load %arg2[%c2_25] : memref<72xf32, #tpu.memory_space<smem>>
    %47 = vector.broadcast %46 : f32 to vector<16x128xf32>
    %48 = arith.mulf %47, %29 : vector<16x128xf32>
    %49 = arith.addf %27, %48 : vector<16x128xf32>
    %c3_26 = arith.constant 3 : index
    %50 = memref.load %arg2[%c3_26] : memref<72xf32, #tpu.memory_space<smem>>
    %51 = vector.broadcast %50 : f32 to vector<16x128xf32>
    %52 = arith.mulf %51, %29 : vector<16x128xf32>
    %53 = arith.addf %27, %52 : vector<16x128xf32>
    %c4_27 = arith.constant 4 : index
    %54 = memref.load %arg2[%c4_27] : memref<72xf32, #tpu.memory_space<smem>>
    %55 = vector.broadcast %54 : f32 to vector<16x128xf32>
    %56 = arith.mulf %55, %29 : vector<16x128xf32>
    %57 = arith.addf %27, %56 : vector<16x128xf32>
    %c5_28 = arith.constant 5 : index
    %58 = memref.load %arg2[%c5_28] : memref<72xf32, #tpu.memory_space<smem>>
    %59 = vector.broadcast %58 : f32 to vector<16x128xf32>
    %60 = arith.mulf %59, %29 : vector<16x128xf32>
    %61 = arith.addf %27, %60 : vector<16x128xf32>
    %c6_29 = arith.constant 6 : index
    %62 = memref.load %arg2[%c6_29] : memref<72xf32, #tpu.memory_space<smem>>
    %63 = vector.broadcast %62 : f32 to vector<16x128xf32>
    %64 = arith.mulf %63, %29 : vector<16x128xf32>
    %65 = arith.addf %27, %64 : vector<16x128xf32>
    %c7_30 = arith.constant 7 : index
    %66 = memref.load %arg2[%c7_30] : memref<72xf32, #tpu.memory_space<smem>>
    %67 = vector.broadcast %66 : f32 to vector<16x128xf32>
    %68 = arith.mulf %67, %29 : vector<16x128xf32>
    %69 = arith.addf %27, %68 : vector<16x128xf32>
    %c8 = arith.constant 8 : index
    %70 = memref.load %arg2[%c8] : memref<72xf32, #tpu.memory_space<smem>>
    %71 = vector.broadcast %70 : f32 to vector<16x128xf32>
    %72 = arith.mulf %71, %29 : vector<16x128xf32>
    %73 = arith.addf %27, %72 : vector<16x128xf32>
    %c1_31 = arith.constant 1 : index
    %c0_32 = arith.constant 0 : index
    %c0_33 = arith.constant 0 : index
    %74 = vector.load %arg0[%c1_31, %c0_32, %c0_33] : memref<8x16x128xf32, #tpu.memory_space<vmem>>, vector<1x16x128xf32>
    %75 = vector.shape_cast %74 : vector<1x16x128xf32> to vector<16x128xf32>
    %76 = arith.subf %75, %26 : vector<16x128xf32>
    %77 = math.exp %76 : vector<16x128xf32>
    %78 = arith.addf %32, %77 : vector<16x128xf32>
    %c1_i32 = arith.constant 1 : i32
    %79 = vector.broadcast %c1_i32 : i32 to vector<16x128xi32>
    %80 = arith.cmpi eq, %3, %79 : vector<16x128xi32>
    %cst_34 = arith.constant 0.000000e+00 : f32
    %81 = vector.broadcast %cst_34 : f32 to vector<16x128xf32>
    %82 = arith.select %80, %75, %81 : vector<16x128xi1>, vector<16x128xf32>
    %83 = arith.addf %37, %82 : vector<16x128xf32>
    %c9 = arith.constant 9 : index
    %84 = memref.load %arg2[%c9] : memref<72xf32, #tpu.memory_space<smem>>
    %85 = vector.broadcast %84 : f32 to vector<16x128xf32>
    %86 = arith.mulf %85, %75 : vector<16x128xf32>
    %87 = arith.addf %41, %86 : vector<16x128xf32>
    %c10 = arith.constant 10 : index
    %88 = memref.load %arg2[%c10] : memref<72xf32, #tpu.memory_space<smem>>
    %89 = vector.broadcast %88 : f32 to vector<16x128xf32>
    %90 = arith.mulf %89, %75 : vector<16x128xf32>
    %91 = arith.addf %45, %90 : vector<16x128xf32>
    %c11 = arith.constant 11 : index
    %92 = memref.load %arg2[%c11] : memref<72xf32, #tpu.memory_space<smem>>
    %93 = vector.broadcast %92 : f32 to vector<16x128xf32>
    %94 = arith.mulf %93, %75 : vector<16x128xf32>
    %95 = arith.addf %49, %94 : vector<16x128xf32>
    %c12 = arith.constant 12 : index
    %96 = memref.load %arg2[%c12] : memref<72xf32, #tpu.memory_space<smem>>
    %97 = vector.broadcast %96 : f32 to vector<16x128xf32>
    %98 = arith.mulf %97, %75 : vector<16x128xf32>
    %99 = arith.addf %53, %98 : vector<16x128xf32>
    %c13 = arith.constant 13 : index
    %100 = memref.load %arg2[%c13] : memref<72xf32, #tpu.memory_space<smem>>
    %101 = vector.broadcast %100 : f32 to vector<16x128xf32>
    %102 = arith.mulf %101, %75 : vector<16x128xf32>
    %103 = arith.addf %57, %102 : vector<16x128xf32>
    %c14 = arith.constant 14 : index
    %104 = memref.load %arg2[%c14] : memref<72xf32, #tpu.memory_space<smem>>
    %105 = vector.broadcast %104 : f32 to vector<16x128xf32>
    %106 = arith.mulf %105, %75 : vector<16x128xf32>
    %107 = arith.addf %61, %106 : vector<16x128xf32>
    %c15 = arith.constant 15 : index
    %108 = memref.load %arg2[%c15] : memref<72xf32, #tpu.memory_space<smem>>
    %109 = vector.broadcast %108 : f32 to vector<16x128xf32>
    %110 = arith.mulf %109, %75 : vector<16x128xf32>
    %111 = arith.addf %65, %110 : vector<16x128xf32>
    %c16 = arith.constant 16 : index
    %112 = memref.load %arg2[%c16] : memref<72xf32, #tpu.memory_space<smem>>
    %113 = vector.broadcast %112 : f32 to vector<16x128xf32>
    %114 = arith.mulf %113, %75 : vector<16x128xf32>
    %115 = arith.addf %69, %114 : vector<16x128xf32>
    %c17 = arith.constant 17 : index
    %116 = memref.load %arg2[%c17] : memref<72xf32, #tpu.memory_space<smem>>
    %117 = vector.broadcast %116 : f32 to vector<16x128xf32>
    %118 = arith.mulf %117, %75 : vector<16x128xf32>
    %119 = arith.addf %73, %118 : vector<16x128xf32>
    %c2_35 = arith.constant 2 : index
    %c0_36 = arith.constant 0 : index
    %c0_37 = arith.constant 0 : index
    %120 = vector.load %arg0[%c2_35, %c0_36, %c0_37] : memref<8x16x128xf32, #tpu.memory_space<vmem>>, vector<1x16x128xf32>
    %121 = vector.shape_cast %120 : vector<1x16x128xf32> to vector<16x128xf32>
    %122 = arith.subf %121, %26 : vector<16x128xf32>
    %123 = math.exp %122 : vector<16x128xf32>
    %124 = arith.addf %78, %123 : vector<16x128xf32>
    %c2_i32 = arith.constant 2 : i32
    %125 = vector.broadcast %c2_i32 : i32 to vector<16x128xi32>
    %126 = arith.cmpi eq, %3, %125 : vector<16x128xi32>
    %cst_38 = arith.constant 0.000000e+00 : f32
    %127 = vector.broadcast %cst_38 : f32 to vector<16x128xf32>
    %128 = arith.select %126, %121, %127 : vector<16x128xi1>, vector<16x128xf32>
    %129 = arith.addf %83, %128 : vector<16x128xf32>
    %c18 = arith.constant 18 : index
    %130 = memref.load %arg2[%c18] : memref<72xf32, #tpu.memory_space<smem>>
    %131 = vector.broadcast %130 : f32 to vector<16x128xf32>
    %132 = arith.mulf %131, %121 : vector<16x128xf32>
    %133 = arith.addf %87, %132 : vector<16x128xf32>
    %c19 = arith.constant 19 : index
    %134 = memref.load %arg2[%c19] : memref<72xf32, #tpu.memory_space<smem>>
    %135 = vector.broadcast %134 : f32 to vector<16x128xf32>
    %136 = arith.mulf %135, %121 : vector<16x128xf32>
    %137 = arith.addf %91, %136 : vector<16x128xf32>
    %c20 = arith.constant 20 : index
    %138 = memref.load %arg2[%c20] : memref<72xf32, #tpu.memory_space<smem>>
    %139 = vector.broadcast %138 : f32 to vector<16x128xf32>
    %140 = arith.mulf %139, %121 : vector<16x128xf32>
    %141 = arith.addf %95, %140 : vector<16x128xf32>
    %c21 = arith.constant 21 : index
    %142 = memref.load %arg2[%c21] : memref<72xf32, #tpu.memory_space<smem>>
    %143 = vector.broadcast %142 : f32 to vector<16x128xf32>
    %144 = arith.mulf %143, %121 : vector<16x128xf32>
    %145 = arith.addf %99, %144 : vector<16x128xf32>
    %c22 = arith.constant 22 : index
    %146 = memref.load %arg2[%c22] : memref<72xf32, #tpu.memory_space<smem>>
    %147 = vector.broadcast %146 : f32 to vector<16x128xf32>
    %148 = arith.mulf %147, %121 : vector<16x128xf32>
    %149 = arith.addf %103, %148 : vector<16x128xf32>
    %c23 = arith.constant 23 : index
    %150 = memref.load %arg2[%c23] : memref<72xf32, #tpu.memory_space<smem>>
    %151 = vector.broadcast %150 : f32 to vector<16x128xf32>
    %152 = arith.mulf %151, %121 : vector<16x128xf32>
    %153 = arith.addf %107, %152 : vector<16x128xf32>
    %c24 = arith.constant 24 : index
    %154 = memref.load %arg2[%c24] : memref<72xf32, #tpu.memory_space<smem>>
    %155 = vector.broadcast %154 : f32 to vector<16x128xf32>
    %156 = arith.mulf %155, %121 : vector<16x128xf32>
    %157 = arith.addf %111, %156 : vector<16x128xf32>
    %c25 = arith.constant 25 : index
    %158 = memref.load %arg2[%c25] : memref<72xf32, #tpu.memory_space<smem>>
    %159 = vector.broadcast %158 : f32 to vector<16x128xf32>
    %160 = arith.mulf %159, %121 : vector<16x128xf32>
    %161 = arith.addf %115, %160 : vector<16x128xf32>
    %c26 = arith.constant 26 : index
    %162 = memref.load %arg2[%c26] : memref<72xf32, #tpu.memory_space<smem>>
    %163 = vector.broadcast %162 : f32 to vector<16x128xf32>
    %164 = arith.mulf %163, %121 : vector<16x128xf32>
    %165 = arith.addf %119, %164 : vector<16x128xf32>
    %c3_39 = arith.constant 3 : index
    %c0_40 = arith.constant 0 : index
    %c0_41 = arith.constant 0 : index
    %166 = vector.load %arg0[%c3_39, %c0_40, %c0_41] : memref<8x16x128xf32, #tpu.memory_space<vmem>>, vector<1x16x128xf32>
    %167 = vector.shape_cast %166 : vector<1x16x128xf32> to vector<16x128xf32>
    %168 = arith.subf %167, %26 : vector<16x128xf32>
    %169 = math.exp %168 : vector<16x128xf32>
    %170 = arith.addf %124, %169 : vector<16x128xf32>
    %c3_i32 = arith.constant 3 : i32
    %171 = vector.broadcast %c3_i32 : i32 to vector<16x128xi32>
    %172 = arith.cmpi eq, %3, %171 : vector<16x128xi32>
    %cst_42 = arith.constant 0.000000e+00 : f32
    %173 = vector.broadcast %cst_42 : f32 to vector<16x128xf32>
    %174 = arith.select %172, %167, %173 : vector<16x128xi1>, vector<16x128xf32>
    %175 = arith.addf %129, %174 : vector<16x128xf32>
    %c27 = arith.constant 27 : index
    %176 = memref.load %arg2[%c27] : memref<72xf32, #tpu.memory_space<smem>>
    %177 = vector.broadcast %176 : f32 to vector<16x128xf32>
    %178 = arith.mulf %177, %167 : vector<16x128xf32>
    %179 = arith.addf %133, %178 : vector<16x128xf32>
    %c28 = arith.constant 28 : index
    %180 = memref.load %arg2[%c28] : memref<72xf32, #tpu.memory_space<smem>>
    %181 = vector.broadcast %180 : f32 to vector<16x128xf32>
    %182 = arith.mulf %181, %167 : vector<16x128xf32>
    %183 = arith.addf %137, %182 : vector<16x128xf32>
    %c29 = arith.constant 29 : index
    %184 = memref.load %arg2[%c29] : memref<72xf32, #tpu.memory_space<smem>>
    %185 = vector.broadcast %184 : f32 to vector<16x128xf32>
    %186 = arith.mulf %185, %167 : vector<16x128xf32>
    %187 = arith.addf %141, %186 : vector<16x128xf32>
    %c30 = arith.constant 30 : index
    %188 = memref.load %arg2[%c30] : memref<72xf32, #tpu.memory_space<smem>>
    %189 = vector.broadcast %188 : f32 to vector<16x128xf32>
    %190 = arith.mulf %189, %167 : vector<16x128xf32>
    %191 = arith.addf %145, %190 : vector<16x128xf32>
    %c31 = arith.constant 31 : index
    %192 = memref.load %arg2[%c31] : memref<72xf32, #tpu.memory_space<smem>>
    %193 = vector.broadcast %192 : f32 to vector<16x128xf32>
    %194 = arith.mulf %193, %167 : vector<16x128xf32>
    %195 = arith.addf %149, %194 : vector<16x128xf32>
    %c32 = arith.constant 32 : index
    %196 = memref.load %arg2[%c32] : memref<72xf32, #tpu.memory_space<smem>>
    %197 = vector.broadcast %196 : f32 to vector<16x128xf32>
    %198 = arith.mulf %197, %167 : vector<16x128xf32>
    %199 = arith.addf %153, %198 : vector<16x128xf32>
    %c33 = arith.constant 33 : index
    %200 = memref.load %arg2[%c33] : memref<72xf32, #tpu.memory_space<smem>>
    %201 = vector.broadcast %200 : f32 to vector<16x128xf32>
    %202 = arith.mulf %201, %167 : vector<16x128xf32>
    %203 = arith.addf %157, %202 : vector<16x128xf32>
    %c34 = arith.constant 34 : index
    %204 = memref.load %arg2[%c34] : memref<72xf32, #tpu.memory_space<smem>>
    %205 = vector.broadcast %204 : f32 to vector<16x128xf32>
    %206 = arith.mulf %205, %167 : vector<16x128xf32>
    %207 = arith.addf %161, %206 : vector<16x128xf32>
    %c35 = arith.constant 35 : index
    %208 = memref.load %arg2[%c35] : memref<72xf32, #tpu.memory_space<smem>>
    %209 = vector.broadcast %208 : f32 to vector<16x128xf32>
    %210 = arith.mulf %209, %167 : vector<16x128xf32>
    %211 = arith.addf %165, %210 : vector<16x128xf32>
    %c4_43 = arith.constant 4 : index
    %c0_44 = arith.constant 0 : index
    %c0_45 = arith.constant 0 : index
    %212 = vector.load %arg0[%c4_43, %c0_44, %c0_45] : memref<8x16x128xf32, #tpu.memory_space<vmem>>, vector<1x16x128xf32>
    %213 = vector.shape_cast %212 : vector<1x16x128xf32> to vector<16x128xf32>
    %214 = arith.subf %213, %26 : vector<16x128xf32>
    %215 = math.exp %214 : vector<16x128xf32>
    %216 = arith.addf %170, %215 : vector<16x128xf32>
    %c4_i32 = arith.constant 4 : i32
    %217 = vector.broadcast %c4_i32 : i32 to vector<16x128xi32>
    %218 = arith.cmpi eq, %3, %217 : vector<16x128xi32>
    %cst_46 = arith.constant 0.000000e+00 : f32
    %219 = vector.broadcast %cst_46 : f32 to vector<16x128xf32>
    %220 = arith.select %218, %213, %219 : vector<16x128xi1>, vector<16x128xf32>
    %221 = arith.addf %175, %220 : vector<16x128xf32>
    %c36 = arith.constant 36 : index
    %222 = memref.load %arg2[%c36] : memref<72xf32, #tpu.memory_space<smem>>
    %223 = vector.broadcast %222 : f32 to vector<16x128xf32>
    %224 = arith.mulf %223, %213 : vector<16x128xf32>
    %225 = arith.addf %179, %224 : vector<16x128xf32>
    %c37 = arith.constant 37 : index
    %226 = memref.load %arg2[%c37] : memref<72xf32, #tpu.memory_space<smem>>
    %227 = vector.broadcast %226 : f32 to vector<16x128xf32>
    %228 = arith.mulf %227, %213 : vector<16x128xf32>
    %229 = arith.addf %183, %228 : vector<16x128xf32>
    %c38 = arith.constant 38 : index
    %230 = memref.load %arg2[%c38] : memref<72xf32, #tpu.memory_space<smem>>
    %231 = vector.broadcast %230 : f32 to vector<16x128xf32>
    %232 = arith.mulf %231, %213 : vector<16x128xf32>
    %233 = arith.addf %187, %232 : vector<16x128xf32>
    %c39 = arith.constant 39 : index
    %234 = memref.load %arg2[%c39] : memref<72xf32, #tpu.memory_space<smem>>
    %235 = vector.broadcast %234 : f32 to vector<16x128xf32>
    %236 = arith.mulf %235, %213 : vector<16x128xf32>
    %237 = arith.addf %191, %236 : vector<16x128xf32>
    %c40 = arith.constant 40 : index
    %238 = memref.load %arg2[%c40] : memref<72xf32, #tpu.memory_space<smem>>
    %239 = vector.broadcast %238 : f32 to vector<16x128xf32>
    %240 = arith.mulf %239, %213 : vector<16x128xf32>
    %241 = arith.addf %195, %240 : vector<16x128xf32>
    %c41 = arith.constant 41 : index
    %242 = memref.load %arg2[%c41] : memref<72xf32, #tpu.memory_space<smem>>
    %243 = vector.broadcast %242 : f32 to vector<16x128xf32>
    %244 = arith.mulf %243, %213 : vector<16x128xf32>
    %245 = arith.addf %199, %244 : vector<16x128xf32>
    %c42 = arith.constant 42 : index
    %246 = memref.load %arg2[%c42] : memref<72xf32, #tpu.memory_space<smem>>
    %247 = vector.broadcast %246 : f32 to vector<16x128xf32>
    %248 = arith.mulf %247, %213 : vector<16x128xf32>
    %249 = arith.addf %203, %248 : vector<16x128xf32>
    %c43 = arith.constant 43 : index
    %250 = memref.load %arg2[%c43] : memref<72xf32, #tpu.memory_space<smem>>
    %251 = vector.broadcast %250 : f32 to vector<16x128xf32>
    %252 = arith.mulf %251, %213 : vector<16x128xf32>
    %253 = arith.addf %207, %252 : vector<16x128xf32>
    %c44 = arith.constant 44 : index
    %254 = memref.load %arg2[%c44] : memref<72xf32, #tpu.memory_space<smem>>
    %255 = vector.broadcast %254 : f32 to vector<16x128xf32>
    %256 = arith.mulf %255, %213 : vector<16x128xf32>
    %257 = arith.addf %211, %256 : vector<16x128xf32>
    %c5_47 = arith.constant 5 : index
    %c0_48 = arith.constant 0 : index
    %c0_49 = arith.constant 0 : index
    %258 = vector.load %arg0[%c5_47, %c0_48, %c0_49] : memref<8x16x128xf32, #tpu.memory_space<vmem>>, vector<1x16x128xf32>
    %259 = vector.shape_cast %258 : vector<1x16x128xf32> to vector<16x128xf32>
    %260 = arith.subf %259, %26 : vector<16x128xf32>
    %261 = math.exp %260 : vector<16x128xf32>
    %262 = arith.addf %216, %261 : vector<16x128xf32>
    %c5_i32 = arith.constant 5 : i32
    %263 = vector.broadcast %c5_i32 : i32 to vector<16x128xi32>
    %264 = arith.cmpi eq, %3, %263 : vector<16x128xi32>
    %cst_50 = arith.constant 0.000000e+00 : f32
    %265 = vector.broadcast %cst_50 : f32 to vector<16x128xf32>
    %266 = arith.select %264, %259, %265 : vector<16x128xi1>, vector<16x128xf32>
    %267 = arith.addf %221, %266 : vector<16x128xf32>
    %c45 = arith.constant 45 : index
    %268 = memref.load %arg2[%c45] : memref<72xf32, #tpu.memory_space<smem>>
    %269 = vector.broadcast %268 : f32 to vector<16x128xf32>
    %270 = arith.mulf %269, %259 : vector<16x128xf32>
    %271 = arith.addf %225, %270 : vector<16x128xf32>
    %c46 = arith.constant 46 : index
    %272 = memref.load %arg2[%c46] : memref<72xf32, #tpu.memory_space<smem>>
    %273 = vector.broadcast %272 : f32 to vector<16x128xf32>
    %274 = arith.mulf %273, %259 : vector<16x128xf32>
    %275 = arith.addf %229, %274 : vector<16x128xf32>
    %c47 = arith.constant 47 : index
    %276 = memref.load %arg2[%c47] : memref<72xf32, #tpu.memory_space<smem>>
    %277 = vector.broadcast %276 : f32 to vector<16x128xf32>
    %278 = arith.mulf %277, %259 : vector<16x128xf32>
    %279 = arith.addf %233, %278 : vector<16x128xf32>
    %c48 = arith.constant 48 : index
    %280 = memref.load %arg2[%c48] : memref<72xf32, #tpu.memory_space<smem>>
    %281 = vector.broadcast %280 : f32 to vector<16x128xf32>
    %282 = arith.mulf %281, %259 : vector<16x128xf32>
    %283 = arith.addf %237, %282 : vector<16x128xf32>
    %c49 = arith.constant 49 : index
    %284 = memref.load %arg2[%c49] : memref<72xf32, #tpu.memory_space<smem>>
    %285 = vector.broadcast %284 : f32 to vector<16x128xf32>
    %286 = arith.mulf %285, %259 : vector<16x128xf32>
    %287 = arith.addf %241, %286 : vector<16x128xf32>
    %c50 = arith.constant 50 : index
    %288 = memref.load %arg2[%c50] : memref<72xf32, #tpu.memory_space<smem>>
    %289 = vector.broadcast %288 : f32 to vector<16x128xf32>
    %290 = arith.mulf %289, %259 : vector<16x128xf32>
    %291 = arith.addf %245, %290 : vector<16x128xf32>
    %c51 = arith.constant 51 : index
    %292 = memref.load %arg2[%c51] : memref<72xf32, #tpu.memory_space<smem>>
    %293 = vector.broadcast %292 : f32 to vector<16x128xf32>
    %294 = arith.mulf %293, %259 : vector<16x128xf32>
    %295 = arith.addf %249, %294 : vector<16x128xf32>
    %c52 = arith.constant 52 : index
    %296 = memref.load %arg2[%c52] : memref<72xf32, #tpu.memory_space<smem>>
    %297 = vector.broadcast %296 : f32 to vector<16x128xf32>
    %298 = arith.mulf %297, %259 : vector<16x128xf32>
    %299 = arith.addf %253, %298 : vector<16x128xf32>
    %c53 = arith.constant 53 : index
    %300 = memref.load %arg2[%c53] : memref<72xf32, #tpu.memory_space<smem>>
    %301 = vector.broadcast %300 : f32 to vector<16x128xf32>
    %302 = arith.mulf %301, %259 : vector<16x128xf32>
    %303 = arith.addf %257, %302 : vector<16x128xf32>
    %c6_51 = arith.constant 6 : index
    %c0_52 = arith.constant 0 : index
    %c0_53 = arith.constant 0 : index
    %304 = vector.load %arg0[%c6_51, %c0_52, %c0_53] : memref<8x16x128xf32, #tpu.memory_space<vmem>>, vector<1x16x128xf32>
    %305 = vector.shape_cast %304 : vector<1x16x128xf32> to vector<16x128xf32>
    %306 = arith.subf %305, %26 : vector<16x128xf32>
    %307 = math.exp %306 : vector<16x128xf32>
    %308 = arith.addf %262, %307 : vector<16x128xf32>
    %c6_i32 = arith.constant 6 : i32
    %309 = vector.broadcast %c6_i32 : i32 to vector<16x128xi32>
    %310 = arith.cmpi eq, %3, %309 : vector<16x128xi32>
    %cst_54 = arith.constant 0.000000e+00 : f32
    %311 = vector.broadcast %cst_54 : f32 to vector<16x128xf32>
    %312 = arith.select %310, %305, %311 : vector<16x128xi1>, vector<16x128xf32>
    %313 = arith.addf %267, %312 : vector<16x128xf32>
    %c54 = arith.constant 54 : index
    %314 = memref.load %arg2[%c54] : memref<72xf32, #tpu.memory_space<smem>>
    %315 = vector.broadcast %314 : f32 to vector<16x128xf32>
    %316 = arith.mulf %315, %305 : vector<16x128xf32>
    %317 = arith.addf %271, %316 : vector<16x128xf32>
    %c55 = arith.constant 55 : index
    %318 = memref.load %arg2[%c55] : memref<72xf32, #tpu.memory_space<smem>>
    %319 = vector.broadcast %318 : f32 to vector<16x128xf32>
    %320 = arith.mulf %319, %305 : vector<16x128xf32>
    %321 = arith.addf %275, %320 : vector<16x128xf32>
    %c56 = arith.constant 56 : index
    %322 = memref.load %arg2[%c56] : memref<72xf32, #tpu.memory_space<smem>>
    %323 = vector.broadcast %322 : f32 to vector<16x128xf32>
    %324 = arith.mulf %323, %305 : vector<16x128xf32>
    %325 = arith.addf %279, %324 : vector<16x128xf32>
    %c57 = arith.constant 57 : index
    %326 = memref.load %arg2[%c57] : memref<72xf32, #tpu.memory_space<smem>>
    %327 = vector.broadcast %326 : f32 to vector<16x128xf32>
    %328 = arith.mulf %327, %305 : vector<16x128xf32>
    %329 = arith.addf %283, %328 : vector<16x128xf32>
    %c58 = arith.constant 58 : index
    %330 = memref.load %arg2[%c58] : memref<72xf32, #tpu.memory_space<smem>>
    %331 = vector.broadcast %330 : f32 to vector<16x128xf32>
    %332 = arith.mulf %331, %305 : vector<16x128xf32>
    %333 = arith.addf %287, %332 : vector<16x128xf32>
    %c59 = arith.constant 59 : index
    %334 = memref.load %arg2[%c59] : memref<72xf32, #tpu.memory_space<smem>>
    %335 = vector.broadcast %334 : f32 to vector<16x128xf32>
    %336 = arith.mulf %335, %305 : vector<16x128xf32>
    %337 = arith.addf %291, %336 : vector<16x128xf32>
    %c60 = arith.constant 60 : index
    %338 = memref.load %arg2[%c60] : memref<72xf32, #tpu.memory_space<smem>>
    %339 = vector.broadcast %338 : f32 to vector<16x128xf32>
    %340 = arith.mulf %339, %305 : vector<16x128xf32>
    %341 = arith.addf %295, %340 : vector<16x128xf32>
    %c61 = arith.constant 61 : index
    %342 = memref.load %arg2[%c61] : memref<72xf32, #tpu.memory_space<smem>>
    %343 = vector.broadcast %342 : f32 to vector<16x128xf32>
    %344 = arith.mulf %343, %305 : vector<16x128xf32>
    %345 = arith.addf %299, %344 : vector<16x128xf32>
    %c62 = arith.constant 62 : index
    %346 = memref.load %arg2[%c62] : memref<72xf32, #tpu.memory_space<smem>>
    %347 = vector.broadcast %346 : f32 to vector<16x128xf32>
    %348 = arith.mulf %347, %305 : vector<16x128xf32>
    %349 = arith.addf %303, %348 : vector<16x128xf32>
    %c7_55 = arith.constant 7 : index
    %c0_56 = arith.constant 0 : index
    %c0_57 = arith.constant 0 : index
    %350 = vector.load %arg0[%c7_55, %c0_56, %c0_57] : memref<8x16x128xf32, #tpu.memory_space<vmem>>, vector<1x16x128xf32>
    %351 = vector.shape_cast %350 : vector<1x16x128xf32> to vector<16x128xf32>
    %352 = arith.subf %351, %26 : vector<16x128xf32>
    %353 = math.exp %352 : vector<16x128xf32>
    %354 = arith.addf %308, %353 : vector<16x128xf32>
    %c7_i32 = arith.constant 7 : i32
    %355 = vector.broadcast %c7_i32 : i32 to vector<16x128xi32>
    %356 = arith.cmpi eq, %3, %355 : vector<16x128xi32>
    %cst_58 = arith.constant 0.000000e+00 : f32
    %357 = vector.broadcast %cst_58 : f32 to vector<16x128xf32>
    %358 = arith.select %356, %351, %357 : vector<16x128xi1>, vector<16x128xf32>
    %359 = arith.addf %313, %358 : vector<16x128xf32>
    %c63 = arith.constant 63 : index
    %360 = memref.load %arg2[%c63] : memref<72xf32, #tpu.memory_space<smem>>
    %361 = vector.broadcast %360 : f32 to vector<16x128xf32>
    %362 = arith.mulf %361, %351 : vector<16x128xf32>
    %363 = arith.addf %317, %362 : vector<16x128xf32>
    %c64 = arith.constant 64 : index
    %364 = memref.load %arg2[%c64] : memref<72xf32, #tpu.memory_space<smem>>
    %365 = vector.broadcast %364 : f32 to vector<16x128xf32>
    %366 = arith.mulf %365, %351 : vector<16x128xf32>
    %367 = arith.addf %321, %366 : vector<16x128xf32>
    %c65 = arith.constant 65 : index
    %368 = memref.load %arg2[%c65] : memref<72xf32, #tpu.memory_space<smem>>
    %369 = vector.broadcast %368 : f32 to vector<16x128xf32>
    %370 = arith.mulf %369, %351 : vector<16x128xf32>
    %371 = arith.addf %325, %370 : vector<16x128xf32>
    %c66 = arith.constant 66 : index
    %372 = memref.load %arg2[%c66] : memref<72xf32, #tpu.memory_space<smem>>
    %373 = vector.broadcast %372 : f32 to vector<16x128xf32>
    %374 = arith.mulf %373, %351 : vector<16x128xf32>
    %375 = arith.addf %329, %374 : vector<16x128xf32>
    %c67 = arith.constant 67 : index
    %376 = memref.load %arg2[%c67] : memref<72xf32, #tpu.memory_space<smem>>
    %377 = vector.broadcast %376 : f32 to vector<16x128xf32>
    %378 = arith.mulf %377, %351 : vector<16x128xf32>
    %379 = arith.addf %333, %378 : vector<16x128xf32>
    %c68 = arith.constant 68 : index
    %380 = memref.load %arg2[%c68] : memref<72xf32, #tpu.memory_space<smem>>
    %381 = vector.broadcast %380 : f32 to vector<16x128xf32>
    %382 = arith.mulf %381, %351 : vector<16x128xf32>
    %383 = arith.addf %337, %382 : vector<16x128xf32>
    %c69 = arith.constant 69 : index
    %384 = memref.load %arg2[%c69] : memref<72xf32, #tpu.memory_space<smem>>
    %385 = vector.broadcast %384 : f32 to vector<16x128xf32>
    %386 = arith.mulf %385, %351 : vector<16x128xf32>
    %387 = arith.addf %341, %386 : vector<16x128xf32>
    %c70 = arith.constant 70 : index
    %388 = memref.load %arg2[%c70] : memref<72xf32, #tpu.memory_space<smem>>
    %389 = vector.broadcast %388 : f32 to vector<16x128xf32>
    %390 = arith.mulf %389, %351 : vector<16x128xf32>
    %391 = arith.addf %345, %390 : vector<16x128xf32>
    %c71 = arith.constant 71 : index
    %392 = memref.load %arg2[%c71] : memref<72xf32, #tpu.memory_space<smem>>
    %393 = vector.broadcast %392 : f32 to vector<16x128xf32>
    %394 = arith.mulf %393, %351 : vector<16x128xf32>
    %395 = arith.addf %349, %394 : vector<16x128xf32>
    %396 = tpu.iota {dimensions = array<i32: 0>} : vector<16x128xi32>
    %397 = tpu.iota {dimensions = array<i32: 1>} : vector<16x128xi32>
    %c1_i32_59 = arith.constant 1 : i32
    %398 = vector.broadcast %c1_i32_59 : i32 to vector<16x128xi32>
    %399 = arith.cmpi sge, %396, %398 : vector<16x128xi32>
    %c14_i32 = arith.constant 14 : i32
    %400 = vector.broadcast %c14_i32 : i32 to vector<16x128xi32>
    %401 = arith.cmpi sle, %396, %400 : vector<16x128xi32>
    %c1_i32_60 = arith.constant 1 : i32
    %402 = vector.broadcast %c1_i32_60 : i32 to vector<16x128xi32>
    %403 = arith.cmpi sge, %397, %402 : vector<16x128xi32>
    %c126_i32 = arith.constant 126 : i32
    %404 = vector.broadcast %c126_i32 : i32 to vector<16x128xi32>
    %405 = arith.cmpi sle, %397, %404 : vector<16x128xi32>
    %c1_i32_61 = arith.constant 1 : i32
    %406 = tpu.dynamic_rotate %363 by %c1_i32_61 dim 1 : vector<16x128xf32>, i32 -> vector<16x128xf32>
    %cst_62 = arith.constant 0.000000e+00 : f32
    %407 = vector.broadcast %cst_62 : f32 to vector<16x128xf32>
    %408 = arith.select %403, %406, %407 : vector<16x128xi1>, vector<16x128xf32>
    %409 = arith.addf %408, %367 : vector<16x128xf32>
    %c127_i32 = arith.constant 127 : i32
    %410 = tpu.dynamic_rotate %371 by %c127_i32 dim 1 : vector<16x128xf32>, i32 -> vector<16x128xf32>
    %cst_63 = arith.constant 0.000000e+00 : f32
    %411 = vector.broadcast %cst_63 : f32 to vector<16x128xf32>
    %412 = arith.select %405, %410, %411 : vector<16x128xi1>, vector<16x128xf32>
    %413 = arith.addf %409, %412 : vector<16x128xf32>
    %c1_i32_64 = arith.constant 1 : i32
    %414 = tpu.dynamic_rotate %413 by %c1_i32_64 dim 0 : vector<16x128xf32>, i32 -> vector<16x128xf32>
    %cst_65 = arith.constant 0.000000e+00 : f32
    %415 = vector.broadcast %cst_65 : f32 to vector<16x128xf32>
    %416 = arith.select %399, %414, %415 : vector<16x128xi1>, vector<16x128xf32>
    %417 = arith.addf %27, %416 : vector<16x128xf32>
    %c1_i32_66 = arith.constant 1 : i32
    %418 = tpu.dynamic_rotate %375 by %c1_i32_66 dim 1 : vector<16x128xf32>, i32 -> vector<16x128xf32>
    %cst_67 = arith.constant 0.000000e+00 : f32
    %419 = vector.broadcast %cst_67 : f32 to vector<16x128xf32>
    %420 = arith.select %403, %418, %419 : vector<16x128xi1>, vector<16x128xf32>
    %421 = arith.addf %420, %379 : vector<16x128xf32>
    %c127_i32_68 = arith.constant 127 : i32
    %422 = tpu.dynamic_rotate %383 by %c127_i32_68 dim 1 : vector<16x128xf32>, i32 -> vector<16x128xf32>
    %cst_69 = arith.constant 0.000000e+00 : f32
    %423 = vector.broadcast %cst_69 : f32 to vector<16x128xf32>
    %424 = arith.select %405, %422, %423 : vector<16x128xi1>, vector<16x128xf32>
    %425 = arith.addf %421, %424 : vector<16x128xf32>
    %426 = arith.addf %417, %425 : vector<16x128xf32>
    %c1_i32_70 = arith.constant 1 : i32
    %427 = tpu.dynamic_rotate %387 by %c1_i32_70 dim 1 : vector<16x128xf32>, i32 -> vector<16x128xf32>
    %cst_71 = arith.constant 0.000000e+00 : f32
    %428 = vector.broadcast %cst_71 : f32 to vector<16x128xf32>
    %429 = arith.select %403, %427, %428 : vector<16x128xi1>, vector<16x128xf32>
    %430 = arith.addf %429, %391 : vector<16x128xf32>
    %c127_i32_72 = arith.constant 127 : i32
    %431 = tpu.dynamic_rotate %395 by %c127_i32_72 dim 1 : vector<16x128xf32>, i32 -> vector<16x128xf32>
    %cst_73 = arith.constant 0.000000e+00 : f32
    %432 = vector.broadcast %cst_73 : f32 to vector<16x128xf32>
    %433 = arith.select %405, %431, %432 : vector<16x128xi1>, vector<16x128xf32>
    %434 = arith.addf %430, %433 : vector<16x128xf32>
    %c15_i32 = arith.constant 15 : i32
    %435 = tpu.dynamic_rotate %434 by %c15_i32 dim 0 : vector<16x128xf32>, i32 -> vector<16x128xf32>
    %cst_74 = arith.constant 0.000000e+00 : f32
    %436 = vector.broadcast %cst_74 : f32 to vector<16x128xf32>
    %437 = arith.select %401, %435, %436 : vector<16x128xi1>, vector<16x128xf32>
    %438 = arith.addf %426, %437 : vector<16x128xf32>
    %439 = math.log %354 : vector<16x128xf32>
    %440 = arith.addf %26, %439 : vector<16x128xf32>
    %c0_75 = arith.constant 0 : index
    %441 = memref.load %arg3[%c0_75] : memref<1xf32, #tpu.memory_space<smem>>
    %442 = vector.broadcast %441 : f32 to vector<16x128xf32>
    %443 = arith.addf %438, %442 : vector<16x128xf32>
    %444 = arith.subf %443, %2 : vector<16x128xf32>
    %445 = arith.subf %440, %359 : vector<16x128xf32>
    %cst_76 = arith.constant 1.000000e-01 : f32
    %446 = vector.broadcast %cst_76 : f32 to vector<16x128xf32>
    %447 = arith.mulf %446, %444 : vector<16x128xf32>
    %448 = arith.mulf %447, %444 : vector<16x128xf32>
    %449 = arith.addf %445, %448 : vector<16x128xf32>
    %450 = vector.shape_cast %449 : vector<16x128xf32> to vector<1x16x128xf32>
    %cst_77 = arith.constant dense<0.000000e+00> : vector<1xf32>
    %451 = vector.multi_reduction <add>, %450, %cst_77 [1, 2] : vector<1x16x128xf32> to vector<1xf32>
    %452 = vector.shape_cast %451 : vector<1xf32> to vector<1x1x1xf32>
    %453 = vector.extract %452[0, 0, 0] : f32 from vector<1x1x1xf32>
    %cst_78 = arith.constant 4.8828125E-4 : f32
    %454 = arith.mulf %453, %cst_78 : f32
    %c0_79 = arith.constant 0 : index
    %455 = memref.load %arg4[%c0_79] : memref<1xf32, #tpu.memory_space<smem>>
    memref.store %454, %arg4[%c0_79] : memref<1xf32, #tpu.memory_space<smem>>
    return
  }
}

</mosaic_0001>

<llo_original>
// kernel: tpu_custom_call.1
$region0: #{tpu_custom_call.1}
  #allocation0 [shape = 'u32[]', space=smem, size = 0x4, offset = 0x4, fixed_abs, tag = 'smem constant byte address 0x4 - core index']
  #allocation1 [shape = 'u32[144,128]{1,0:T(1,128)}', space=vmem, size = 0x12000, scoped, tag = 'internal scratch']
  #allocation2 [shape = 'f32[1]{0:T(128)S(6)}', space=smem, size = 0x200, scoped, tag = 'scoped memory for tpu_custom_call.1']
  %s0 = inlined_call_operand.hbm [shape: f32[8,16,128], index: 0, kind: input, shape index: {}]
  %s1 = inlined_call_operand.hbm [shape: f32[16,128], index: 1, kind: input, shape index: {}]
  %s2 = inlined_call_operand.vmem [shape: f32[72], index: 2, kind: input, shape index: {}]
  %s3 = inlined_call_operand.<no memory space> [shape: f32[1], index: 3, kind: input, shape index: {}]
  %s4 = inlined_call_operand.hbm [shape: f32[1], index: 4, kind: output, shape index: {}]
  %s5 = sld [smem:[#allocation0]]
  $region38: #{tpu_custom_call.1} parent=0
    _
  %s7 = ssub.s32 1, %s5
  %s8 = scalar_select 0, %s7, %s5
  %9 = sst [smem:[#allocation2]] %s3
  $region1: #{tpu_custom_call.1} parent=0
    #allocation3 [shape = 'u8[65536]{0}', space=vmem, size = 0x10000, scoped, tag = 'input window, operand 0, single buffered']
    #allocation4 [shape = 's32[1]{0}', space=sflag, size = 0x4, scoped, tag = 'scoped memory for tpu_custom_call.1']
    #allocation5 [shape = 's32[1]{0}', space=sflag, size = 0x4, scoped, tag = 'scoped memory for tpu_custom_call.1']
    #allocation6 [shape = 's32[1]{0}', space=sflag, size = 0x4, scoped, tag = 'scoped memory for tpu_custom_call.1']
    #allocation7 [shape = 'u8[8192]{0}', space=vmem, size = 0x2000, scoped, tag = 'input window, operand 1, single buffered']
    #allocation8 [shape = 's32[1]{0}', space=sflag, size = 0x4, scoped, tag = 'scoped memory for tpu_custom_call.1']
    #allocation9 [shape = 'u8[512]{0}', space=smem, size = 0x200, scoped, tag = 'input window, operand 2, single buffered']
    #allocation10 [shape = 'u8[512]{0}', space=smem, size = 0x200, scoped, tag = 'output window, operand 0, single buffered']
    %10 = vsyncpa [#allocation4], 0
    %11 = vsyncpa [#allocation8], 0
    %12 = vsyncpa [#allocation6], 0
    %13 = vsyncpa [#allocation5], 0
    // Predicated region
    $region2: #{tpu_custom_call.1} parent=1 // pred_check
      _
    $region3: #{tpu_custom_call.1} parent=1 // pred_check_branch
      %15 = sbr.rel (0) target = $region5
    $region4: #{tpu_custom_call.1} parent=1 // pred_region
      %s17 = ssub.s32 2048, 2048
      %18 = vsyncadd [#allocation4], %s17
      %s19 = sshll.u32 [#allocation3], 4
      %s20 = int_to_ptr.vmem [resolvable:$true] %s19
      %25 = dma.hbm_to_vmem [thread:$0]  %s0, 2048, %s20, [#allocation4], 128, 128, 8
    $region5: #{tpu_custom_call.1} parent=1 // pred_fallthru
      _
    // Predicated region
    $region6: #{tpu_custom_call.1} parent=1 // pred_check
      _
    $region7: #{tpu_custom_call.1} parent=1 // pred_check_branch
      %27 = sbr.rel (0) target = $region9
    $region8: #{tpu_custom_call.1} parent=1 // pred_region
      %s29 = ssub.s32 256, 256
      %30 = vsyncadd [#allocation8], %s29
      %s31 = sshll.u32 [#allocation7], 4
      %s32 = int_to_ptr.vmem [resolvable:$true] %s31
      %37 = dma.hbm_to_vmem [thread:$0]  %s1, 256, %s32, [#allocation8], 128, 128, 8
    $region9: #{tpu_custom_call.1} parent=1 // pred_fallthru
      _
    // Predicated region
    $region10: #{tpu_custom_call.1} parent=1 // pred_check
      _
    $region11: #{tpu_custom_call.1} parent=1 // pred_check_branch
      %39 = sbr.rel (0) target = $region13
    $region12: #{tpu_custom_call.1} parent=1 // pred_region
      %s41 = ssub.s32 16, 16
      %42 = vsyncadd [#allocation6], %s41
      %s44 = sshll.u32 %s2, 4
      %s45 = int_to_ptr.vmem [resolvable:$true] %s44
      %47 = dma.vmem_to_smem %s45, 16, [#allocation9], [#allocation6]
    $region13: #{tpu_custom_call.1} parent=1 // pred_fallthru
      _
    // Predicated region
    $region14: #{tpu_custom_call.1} parent=1 // pred_check
      _
    $region15: #{tpu_custom_call.1} parent=1 // pred_check_branch
      %49 = sbr.rel (0) target = $region17
    $region16: #{tpu_custom_call.1} parent=1 // pred_region
      _
    $region17: #{tpu_custom_call.1} parent=1 // pred_fallthru
      _
    // Predicated region
    $region18: #{tpu_custom_call.1} parent=1 // pred_check
      _
    $region19: #{tpu_custom_call.1} parent=1 // pred_check_branch
      %51 = sbr.rel (0) target = $region21
    $region20: #{tpu_custom_call.1} parent=1 // pred_region
      %52 = dma.done [#allocation4], 2048
    $region21: #{tpu_custom_call.1} parent=1 // pred_fallthru
      _
    // Predicated region
    $region22: #{tpu_custom_call.1} parent=1 // pred_check
      _
    $region23: #{tpu_custom_call.1} parent=1 // pred_check_branch
      %54 = sbr.rel (0) target = $region25
    $region24: #{tpu_custom_call.1} parent=1 // pred_region
      %55 = dma.done [#allocation8], 256
    $region25: #{tpu_custom_call.1} parent=1 // pred_fallthru
      _
    // Predicated region
    $region26: #{tpu_custom_call.1} parent=1 // pred_check
      _
    $region27: #{tpu_custom_call.1} parent=1 // pred_check_branch
      %57 = sbr.rel (0) target = $region29
    $region28: #{tpu_custom_call.1} parent=1 // pred_region
      %58 = dma.done [#allocation6], 16
    $region29: #{tpu_custom_call.1} parent=1 // pred_fallthru
      _
    %59 = sfence
    %v60 = vld [vmem:[#allocation7] sm:$0xff]
    %v61 = vld [vmem:[#allocation7 + $0x8] sm:$0xff]
    %v62 = vmul.f32 %v60, 10.0
    %v63 = vmul.f32 %v61, 10.0
    %v64 = vcvt.f32.s32.to.zero.pseudo %v62
    %v65 = vcvt.f32.s32.to.zero.pseudo %v63
    %v66 = vld [vmem:[#allocation3] sm:$0xff]
    %v67 = vld [vmem:[#allocation3 + $0x8] sm:$0xff]
    %s68 = scalar_lea.vmem [#allocation3], 16
    %v69 = vld [vmem:[%s68] sm:$0xff]
    %v70 = vld [vmem:[%s68 + $0x8] sm:$0xff]
    %v71 = vmax.f32 %v66, %v69
    %v72 = vmax.f32 %v67, %v70
    %s73 = scalar_lea.vmem [#allocation3], 32
    %v74 = vld [vmem:[%s73] sm:$0xff]
    %v75 = vld [vmem:[%s73 + $0x8] sm:$0xff]
    %v76 = vmax.f32 %v71, %v74
    %v77 = vmax.f32 %v72, %v75
    %s78 = scalar_lea.vmem [#allocation3], 48
    %v79 = vld [vmem:[%s78] sm:$0xff]
    %v80 = vld [vmem:[%s78 + $0x8] sm:$0xff]
    %v81 = vmax.f32 %v76, %v79
    %v82 = vmax.f32 %v77, %v80
    %s83 = scalar_lea.vmem [#allocation3], 64
    %v84 = vld [vmem:[%s83] sm:$0xff]
    %v85 = vld [vmem:[%s83 + $0x8] sm:$0xff]
    %v86 = vmax.f32 %v81, %v84
    %v87 = vmax.f32 %v82, %v85
    %s88 = scalar_lea.vmem [#allocation3], 80
    %v89 = vld [vmem:[%s88] sm:$0xff]
    %v90 = vld [vmem:[%s88 + $0x8] sm:$0xff]
    %v91 = vmax.f32 %v86, %v89
    %v92 = vmax.f32 %v87, %v90
    %s93 = scalar_lea.vmem [#allocation3], 96
    %v94 = vld [vmem:[%s93] sm:$0xff]
    %v95 = vld [vmem:[%s93 + $0x8] sm:$0xff]
    %v96 = vmax.f32 %v91, %v94
    %v97 = vmax.f32 %v92, %v95
    %s98 = scalar_lea.vmem [#allocation3], 112
    %v99 = vld [vmem:[%s98] sm:$0xff]
    %v100 = vld [vmem:[%s98 + $0x8] sm:$0xff]
    %v101 = vmax.f32 %v96, %v99
    %v102 = vmax.f32 %v97, %v100
    %v103 = vsub.f32 %v66, %v101
    %v104 = vsub.f32 %v67, %v102
    %v105 = vmul.f32 %v103, 1.442695
    %v106 = vpow.pop %v105
    %v107 = vmul.f32 %v104, 1.442695
    %v108 = vpow.pop %v107
    %v109 = vadd.f32 %v106, 0.0
    %v110 = vadd.f32 %v108, 0.0
    %vm111 = vcmp.eq.s32.totalorder %v64, 0
    %vm112 = vcmp.eq.s32.totalorder %v65, 0
    %v113 = vsel %vm111, %v66, 0.0
    %v114 = vsel %vm112, %v67, 0.0
    %v115 = vadd.f32 %v113, 0.0
    %v116 = vadd.f32 %v114, 0.0
    %s117 = sld [smem:[#allocation9]]
    %v118 = vstv %s117
    %v119 = vmul.f32 %v118, %v66
    %v120 = vmul.f32 %v118, %v67
    %v121 = vadd.f32 %v119, 0.0
    %v122 = vadd.f32 %v120, 0.0
    %s123 = sld [smem:[#allocation9 + $0x1]]
    %v124 = vstv %s123
    %v125 = vmul.f32 %v124, %v66
    %v126 = vmul.f32 %v124, %v67
    %v127 = vadd.f32 %v125, 0.0
    %v128 = vadd.f32 %v126, 0.0
    %s129 = sld [smem:[#allocation9 + $0x2]]
    %v130 = vstv %s129
    %v131 = vmul.f32 %v130, %v66
    %v132 = vmul.f32 %v130, %v67
    %v133 = vadd.f32 %v131, 0.0
    %v134 = vadd.f32 %v132, 0.0
    %s135 = sld [smem:[#allocation9 + $0x3]]
    %v136 = vstv %s135
    %v137 = vmul.f32 %v136, %v66
    %v138 = vmul.f32 %v136, %v67
    %v139 = vadd.f32 %v137, 0.0
    %v140 = vadd.f32 %v138, 0.0
    %s141 = sld [smem:[#allocation9 + $0x4]]
    %v142 = vstv %s141
    %v143 = vmul.f32 %v142, %v66
    %v144 = vmul.f32 %v142, %v67
    %v145 = vadd.f32 %v143, 0.0
    %v146 = vadd.f32 %v144, 0.0
    %s147 = sld [smem:[#allocation9 + $0x5]]
    %v148 = vstv %s147
    %v149 = vmul.f32 %v148, %v66
    %v150 = vmul.f32 %v148, %v67
    %v151 = vadd.f32 %v149, 0.0
    %v152 = vadd.f32 %v150, 0.0
    %s153 = sld [smem:[#allocation9 + $0x6]]
    %v154 = vstv %s153
    %v155 = vmul.f32 %v154, %v66
    %v156 = vmul.f32 %v154, %v67
    %v157 = vadd.f32 %v155, 0.0
    %v158 = vadd.f32 %v156, 0.0
    %s159 = sld [smem:[#allocation9 + $0x7]]
    %v160 = vstv %s159
    %v161 = vmul.f32 %v160, %v66
    %v162 = vmul.f32 %v160, %v67
    %v163 = vadd.f32 %v161, 0.0
    %v164 = vadd.f32 %v162, 0.0
    %s165 = sld [smem:[#allocation9 + $0x8]]
    %v166 = vstv %s165
    %v167 = vmul.f32 %v166, %v66
    %v168 = vmul.f32 %v166, %v67
    %v169 = vadd.f32 %v167, 0.0
    %v170 = vadd.f32 %v168, 0.0
    %v171 = vsub.f32 %v69, %v101
    %v172 = vsub.f32 %v70, %v102
    %v173 = vmul.f32 %v171, 1.442695
    %v174 = vpow.pop %v173
    %v175 = vmul.f32 %v172, 1.442695
    %v176 = vpow.pop %v175
    %v177 = vadd.f32 %v109, %v174
    %v178 = vadd.f32 %v110, %v176
    %vm179 = vcmp.eq.s32.totalorder %v64, 1
    %vm180 = vcmp.eq.s32.totalorder %v65, 1
    %v181 = vsel %vm179, %v69, 0.0
    %v182 = vsel %vm180, %v70, 0.0
    %v183 = vadd.f32 %v115, %v181
    %v184 = vadd.f32 %v116, %v182
    %s185 = sld [smem:[#allocation9 + $0x9]]
    %v186 = vstv %s185
    %v187 = vmul.f32 %v186, %v69
    %v188 = vmul.f32 %v186, %v70
    %v189 = vadd.f32 %v121, %v187
    %v190 = vadd.f32 %v122, %v188
    %s191 = sld [smem:[#allocation9 + $0xa]]
    %v192 = vstv %s191
    %v193 = vmul.f32 %v192, %v69
    %v194 = vmul.f32 %v192, %v70
    %v195 = vadd.f32 %v127, %v193
    %v196 = vadd.f32 %v128, %v194
    %s197 = sld [smem:[#allocation9 + $0xb]]
    %v198 = vstv %s197
    %v199 = vmul.f32 %v198, %v69
    %v200 = vmul.f32 %v198, %v70
    %v201 = vadd.f32 %v133, %v199
    %v202 = vadd.f32 %v134, %v200
    %s203 = sld [smem:[#allocation9 + $0xc]]
    %v204 = vstv %s203
    %v205 = vmul.f32 %v204, %v69
    %v206 = vmul.f32 %v204, %v70
    %v207 = vadd.f32 %v139, %v205
    %v208 = vadd.f32 %v140, %v206
    %s209 = sld [smem:[#allocation9 + $0xd]]
    %v210 = vstv %s209
    %v211 = vmul.f32 %v210, %v69
    %v212 = vmul.f32 %v210, %v70
    %v213 = vadd.f32 %v145, %v211
    %v214 = vadd.f32 %v146, %v212
    %s215 = sld [smem:[#allocation9 + $0xe]]
    %v216 = vstv %s215
    %v217 = vmul.f32 %v216, %v69
    %v218 = vmul.f32 %v216, %v70
    %v219 = vadd.f32 %v151, %v217
    %v220 = vadd.f32 %v152, %v218
    %s221 = sld [smem:[#allocation9 + $0xf]]
    %v222 = vstv %s221
    %v223 = vmul.f32 %v222, %v69
    %v224 = vmul.f32 %v222, %v70
    %v225 = vadd.f32 %v157, %v223
    %v226 = vadd.f32 %v158, %v224
    %s227 = sld [smem:[#allocation9 + $0x10]]
    %v228 = vstv %s227
    %v229 = vmul.f32 %v228, %v69
    %v230 = vmul.f32 %v228, %v70
    %v231 = vadd.f32 %v163, %v229
    %v232 = vadd.f32 %v164, %v230
    %s233 = sld [smem:[#allocation9 + $0x11]]
    %v234 = vstv %s233
    %v235 = vmul.f32 %v234, %v69
    %v236 = vmul.f32 %v234, %v70
    %v237 = vadd.f32 %v169, %v235
    %v238 = vadd.f32 %v170, %v236
    %v239 = vsub.f32 %v74, %v101
    %v240 = vsub.f32 %v75, %v102
    %v241 = vmul.f32 %v239, 1.442695
    %v242 = vpow.pop %v241
    %v243 = vmul.f32 %v240, 1.442695
    %v244 = vpow.pop %v243
    %v245 = vadd.f32 %v177, %v242
    %v246 = vadd.f32 %v178, %v244
    %vm247 = vcmp.eq.s32.totalorder %v64, 2
    %vm248 = vcmp.eq.s32.totalorder %v65, 2
    %v249 = vsel %vm247, %v74, 0.0
    %v250 = vsel %vm248, %v75, 0.0
    %v251 = vadd.f32 %v183, %v249
    %v252 = vadd.f32 %v184, %v250
    %s253 = sld [smem:[#allocation9 + $0x12]]
    %v254 = vstv %s253
    %v255 = vmul.f32 %v254, %v74
    %v256 = vmul.f32 %v254, %v75
    %v257 = vadd.f32 %v189, %v255
    %v258 = vadd.f32 %v190, %v256
    %s259 = sld [smem:[#allocation9 + $0x13]]
    %v260 = vstv %s259
    %v261 = vmul.f32 %v260, %v74
    %v262 = vmul.f32 %v260, %v75
    %v263 = vadd.f32 %v195, %v261
    %v264 = vadd.f32 %v196, %v262
    %s265 = sld [smem:[#allocation9 + $0x14]]
    %v266 = vstv %s265
    %v267 = vmul.f32 %v266, %v74
    %v268 = vmul.f32 %v266, %v75
    %v269 = vadd.f32 %v201, %v267
    %v270 = vadd.f32 %v202, %v268
    %s271 = sld [smem:[#allocation9 + $0x15]]
    %v272 = vstv %s271
    %v273 = vmul.f32 %v272, %v74
    %v274 = vmul.f32 %v272, %v75
    %v275 = vadd.f32 %v207, %v273
    %v276 = vadd.f32 %v208, %v274
    %s277 = sld [smem:[#allocation9 + $0x16]]
    %v278 = vstv %s277
    %v279 = vmul.f32 %v278, %v74
    %v280 = vmul.f32 %v278, %v75
    %v281 = vadd.f32 %v213, %v279
    %v282 = vadd.f32 %v214, %v280
    %s283 = sld [smem:[#allocation9 + $0x17]]
    %v284 = vstv %s283
    %v285 = vmul.f32 %v284, %v74
    %v286 = vmul.f32 %v284, %v75
    %v287 = vadd.f32 %v219, %v285
    %v288 = vadd.f32 %v220, %v286
    %s289 = sld [smem:[#allocation9 + $0x18]]
    %v290 = vstv %s289
    %v291 = vmul.f32 %v290, %v74
    %v292 = vmul.f32 %v290, %v75
    %v293 = vadd.f32 %v225, %v291
    %v294 = vadd.f32 %v226, %v292
    %s295 = sld [smem:[#allocation9 + $0x19]]
    %v296 = vstv %s295
    %v297 = vmul.f32 %v296, %v74
    %v298 = vmul.f32 %v296, %v75
    %v299 = vadd.f32 %v231, %v297
    %v300 = vadd.f32 %v232, %v298
    %s301 = sld [smem:[#allocation9 + $0x1a]]
    %v302 = vstv %s301
    %v303 = vmul.f32 %v302, %v74
    %v304 = vmul.f32 %v302, %v75
    %v305 = vadd.f32 %v237, %v303
    %v306 = vadd.f32 %v238, %v304
    %v307 = vsub.f32 %v79, %v101
    %v308 = vsub.f32 %v80, %v102
    %v309 = vmul.f32 %v307, 1.442695
    %v310 = vpow.pop %v309
    %v311 = vmul.f32 %v308, 1.442695
    %v312 = vpow.pop %v311
    %v313 = vadd.f32 %v245, %v310
    %v314 = vadd.f32 %v246, %v312
    %vm315 = vcmp.eq.s32.totalorder %v64, 3
    %vm316 = vcmp.eq.s32.totalorder %v65, 3
    %v317 = vsel %vm315, %v79, 0.0
    %v318 = vsel %vm316, %v80, 0.0
    %v319 = vadd.f32 %v251, %v317
    %v320 = vadd.f32 %v252, %v318
    %s321 = sld [smem:[#allocation9 + $0x1b]]
    %v322 = vstv %s321
    %v323 = vmul.f32 %v322, %v79
    %v324 = vmul.f32 %v322, %v80
    %v325 = vadd.f32 %v257, %v323
    %v326 = vadd.f32 %v258, %v324
    %s327 = sld [smem:[#allocation9 + $0x1c]]
    %v328 = vstv %s327
    %v329 = vmul.f32 %v328, %v79
    %v330 = vmul.f32 %v328, %v80
    %v331 = vadd.f32 %v263, %v329
    %v332 = vadd.f32 %v264, %v330
    %s333 = sld [smem:[#allocation9 + $0x1d]]
    %v334 = vstv %s333
    %v335 = vmul.f32 %v334, %v79
    %v336 = vmul.f32 %v334, %v80
    %v337 = vadd.f32 %v269, %v335
    %v338 = vadd.f32 %v270, %v336
    %s339 = sld [smem:[#allocation9 + $0x1e]]
    %v340 = vstv %s339
    %v341 = vmul.f32 %v340, %v79
    %v342 = vmul.f32 %v340, %v80
    %v343 = vadd.f32 %v275, %v341
    %v344 = vadd.f32 %v276, %v342
    %s345 = sld [smem:[#allocation9 + $0x1f]]
    %v346 = vstv %s345
    %v347 = vmul.f32 %v346, %v79
    %v348 = vmul.f32 %v346, %v80
    %v349 = vadd.f32 %v281, %v347
    %v350 = vadd.f32 %v282, %v348
    %s351 = sld [smem:[#allocation9 + $0x20]]
    %v352 = vstv %s351
    %v353 = vmul.f32 %v352, %v79
    %v354 = vmul.f32 %v352, %v80
    %v355 = vadd.f32 %v287, %v353
    %v356 = vadd.f32 %v288, %v354
    %s357 = sld [smem:[#allocation9 + $0x21]]
    %v358 = vstv %s357
    %v359 = vmul.f32 %v358, %v79
    %v360 = vmul.f32 %v358, %v80
    %v361 = vadd.f32 %v293, %v359
    %v362 = vadd.f32 %v294, %v360
    %s363 = sld [smem:[#allocation9 + $0x22]]
    %v364 = vstv %s363
    %v365 = vmul.f32 %v364, %v79
    %v366 = vmul.f32 %v364, %v80
    %v367 = vadd.f32 %v299, %v365
    %v368 = vadd.f32 %v300, %v366
    %s369 = sld [smem:[#allocation9 + $0x23]]
    %v370 = vstv %s369
    %v371 = vmul.f32 %v370, %v79
    %v372 = vmul.f32 %v370, %v80
    %v373 = vadd.f32 %v305, %v371
    %v374 = vadd.f32 %v306, %v372
    %v375 = vsub.f32 %v84, %v101
    %v376 = vsub.f32 %v85, %v102
    %v377 = vmul.f32 %v375, 1.442695
    %v378 = vpow.pop %v377
    %v379 = vmul.f32 %v376, 1.442695
    %v380 = vpow.pop %v379
    %v381 = vadd.f32 %v313, %v378
    %v382 = vadd.f32 %v314, %v380
    %vm383 = vcmp.eq.s32.totalorder %v64, 4
    %vm384 = vcmp.eq.s32.totalorder %v65, 4
    %v385 = vsel %vm383, %v84, 0.0
    %v386 = vsel %vm384, %v85, 0.0
    %v387 = vadd.f32 %v319, %v385
    %v388 = vadd.f32 %v320, %v386
    %s389 = sld [smem:[#allocation9 + $0x24]]
    %v390 = vstv %s389
    %v391 = vmul.f32 %v390, %v84
    %v392 = vmul.f32 %v390, %v85
    %v393 = vadd.f32 %v325, %v391
    %v394 = vadd.f32 %v326, %v392
    %s395 = sld [smem:[#allocation9 + $0x25]]
    %v396 = vstv %s395
    %v397 = vmul.f32 %v396, %v84
    %v398 = vmul.f32 %v396, %v85
    %v399 = vadd.f32 %v331, %v397
    %v400 = vadd.f32 %v332, %v398
    %s401 = sld [smem:[#allocation9 + $0x26]]
    %v402 = vstv %s401
    %v403 = vmul.f32 %v402, %v84
    %v404 = vmul.f32 %v402, %v85
    %v405 = vadd.f32 %v337, %v403
    %v406 = vadd.f32 %v338, %v404
    %s407 = sld [smem:[#allocation9 + $0x27]]
    %v408 = vstv %s407
    %v409 = vmul.f32 %v408, %v84
    %v410 = vmul.f32 %v408, %v85
    %v411 = vadd.f32 %v343, %v409
    %v412 = vadd.f32 %v344, %v410
    %s413 = sld [smem:[#allocation9 + $0x28]]
    %v414 = vstv %s413
    %v415 = vmul.f32 %v414, %v84
    %v416 = vmul.f32 %v414, %v85
    %v417 = vadd.f32 %v349, %v415
    %v418 = vadd.f32 %v350, %v416
    %s419 = sld [smem:[#allocation9 + $0x29]]
    %v420 = vstv %s419
    %v421 = vmul.f32 %v420, %v84
    %v422 = vmul.f32 %v420, %v85
    %v423 = vadd.f32 %v355, %v421
    %v424 = vadd.f32 %v356, %v422
    %s425 = sld [smem:[#allocation9 + $0x2a]]
    %v426 = vstv %s425
    %v427 = vmul.f32 %v426, %v84
    %v428 = vmul.f32 %v426, %v85
    %v429 = vadd.f32 %v361, %v427
    %v430 = vadd.f32 %v362, %v428
    %s431 = sld [smem:[#allocation9 + $0x2b]]
    %v432 = vstv %s431
    %v433 = vmul.f32 %v432, %v84
    %v434 = vmul.f32 %v432, %v85
    %v435 = vadd.f32 %v367, %v433
    %v436 = vadd.f32 %v368, %v434
    %s437 = sld [smem:[#allocation9 + $0x2c]]
    %v438 = vstv %s437
    %v439 = vmul.f32 %v438, %v84
    %v440 = vmul.f32 %v438, %v85
    %v441 = vadd.f32 %v373, %v439
    %v442 = vadd.f32 %v374, %v440
    %v443 = vsub.f32 %v89, %v101
    %v444 = vsub.f32 %v90, %v102
    %v445 = vmul.f32 %v443, 1.442695
    %v446 = vpow.pop %v445
    %v447 = vmul.f32 %v444, 1.442695
    %v448 = vpow.pop %v447
    %v449 = vadd.f32 %v381, %v446
    %v450 = vadd.f32 %v382, %v448
    %vm451 = vcmp.eq.s32.totalorder %v64, 5
    %vm452 = vcmp.eq.s32.totalorder %v65, 5
    %v453 = vsel %vm451, %v89, 0.0
    %v454 = vsel %vm452, %v90, 0.0
    %v455 = vadd.f32 %v387, %v453
    %v456 = vadd.f32 %v388, %v454
    %s457 = sld [smem:[#allocation9 + $0x2d]]
    %v458 = vstv %s457
    %v459 = vmul.f32 %v458, %v89
    %v460 = vmul.f32 %v458, %v90
    %v461 = vadd.f32 %v393, %v459
    %v462 = vadd.f32 %v394, %v460
    %s463 = sld [smem:[#allocation9 + $0x2e]]
    %v464 = vstv %s463
    %v465 = vmul.f32 %v464, %v89
    %v466 = vmul.f32 %v464, %v90
    %v467 = vadd.f32 %v399, %v465
    %v468 = vadd.f32 %v400, %v466
    %s469 = sld [smem:[#allocation9 + $0x2f]]
    %v470 = vstv %s469
    %v471 = vmul.f32 %v470, %v89
    %v472 = vmul.f32 %v470, %v90
    %v473 = vadd.f32 %v405, %v471
    %v474 = vadd.f32 %v406, %v472
    %s475 = sld [smem:[#allocation9 + $0x30]]
    %v476 = vstv %s475
    %v477 = vmul.f32 %v476, %v89
    %v478 = vmul.f32 %v476, %v90
    %v479 = vadd.f32 %v411, %v477
    %v480 = vadd.f32 %v412, %v478
    %s481 = sld [smem:[#allocation9 + $0x31]]
    %v482 = vstv %s481
    %v483 = vmul.f32 %v482, %v89
    %v484 = vmul.f32 %v482, %v90
    %v485 = vadd.f32 %v417, %v483
    %v486 = vadd.f32 %v418, %v484
    %s487 = sld [smem:[#allocation9 + $0x32]]
    %v488 = vstv %s487
    %v489 = vmul.f32 %v488, %v89
    %v490 = vmul.f32 %v488, %v90
    %v491 = vadd.f32 %v423, %v489
    %v492 = vadd.f32 %v424, %v490
    %s493 = sld [smem:[#allocation9 + $0x33]]
    %v494 = vstv %s493
    %v495 = vmul.f32 %v494, %v89
    %v496 = vmul.f32 %v494, %v90
    %v497 = vadd.f32 %v429, %v495
    %v498 = vadd.f32 %v430, %v496
    %s499 = sld [smem:[#allocation9 + $0x34]]
    %v500 = vstv %s499
    %v501 = vmul.f32 %v500, %v89
    %v502 = vmul.f32 %v500, %v90
    %v503 = vadd.f32 %v435, %v501
    %v504 = vadd.f32 %v436, %v502
    %s505 = sld [smem:[#allocation9 + $0x35]]
    %v506 = vstv %s505
    %v507 = vmul.f32 %v506, %v89
    %v508 = vmul.f32 %v506, %v90
    %v509 = vadd.f32 %v441, %v507
    %v510 = vadd.f32 %v442, %v508
    %v511 = vsub.f32 %v94, %v101
    %v512 = vsub.f32 %v95, %v102
    %v513 = vmul.f32 %v511, 1.442695
    %v514 = vpow.pop %v513
    %v515 = vmul.f32 %v512, 1.442695
    %v516 = vpow.pop %v515
    %v517 = vadd.f32 %v449, %v514
    %v518 = vadd.f32 %v450, %v516
    %vm519 = vcmp.eq.s32.totalorder %v64, 6
    %vm520 = vcmp.eq.s32.totalorder %v65, 6
    %v521 = vsel %vm519, %v94, 0.0
    %v522 = vsel %vm520, %v95, 0.0
    %v523 = vadd.f32 %v455, %v521
    %v524 = vadd.f32 %v456, %v522
    %s525 = sld [smem:[#allocation9 + $0x36]]
    %v526 = vstv %s525
    %v527 = vmul.f32 %v526, %v94
    %v528 = vmul.f32 %v526, %v95
    %v529 = vadd.f32 %v461, %v527
    %v530 = vadd.f32 %v462, %v528
    %s531 = sld [smem:[#allocation9 + $0x37]]
    %v532 = vstv %s531
    %v533 = vmul.f32 %v532, %v94
    %v534 = vmul.f32 %v532, %v95
    %v535 = vadd.f32 %v467, %v533
    %v536 = vadd.f32 %v468, %v534
    %s537 = sld [smem:[#allocation9 + $0x38]]
    %v538 = vstv %s537
    %v539 = vmul.f32 %v538, %v94
    %v540 = vmul.f32 %v538, %v95
    %v541 = vadd.f32 %v473, %v539
    %v542 = vadd.f32 %v474, %v540
    %s543 = sld [smem:[#allocation9 + $0x39]]
    %v544 = vstv %s543
    %v545 = vmul.f32 %v544, %v94
    %v546 = vmul.f32 %v544, %v95
    %v547 = vadd.f32 %v479, %v545
    %v548 = vadd.f32 %v480, %v546
    %s549 = sld [smem:[#allocation9 + $0x3a]]
    %v550 = vstv %s549
    %v551 = vmul.f32 %v550, %v94
    %v552 = vmul.f32 %v550, %v95
    %v553 = vadd.f32 %v485, %v551
    %v554 = vadd.f32 %v486, %v552
    %s555 = sld [smem:[#allocation9 + $0x3b]]
    %v556 = vstv %s555
    %v557 = vmul.f32 %v556, %v94
    %v558 = vmul.f32 %v556, %v95
    %v559 = vadd.f32 %v491, %v557
    %v560 = vadd.f32 %v492, %v558
    %s561 = sld [smem:[#allocation9 + $0x3c]]
    %v562 = vstv %s561
    %v563 = vmul.f32 %v562, %v94
    %v564 = vmul.f32 %v562, %v95
    %v565 = vadd.f32 %v497, %v563
    %v566 = vadd.f32 %v498, %v564
    %s567 = sld [smem:[#allocation9 + $0x3d]]
    %v568 = vstv %s567
    %v569 = vmul.f32 %v568, %v94
    %v570 = vmul.f32 %v568, %v95
    %v571 = vadd.f32 %v503, %v569
    %v572 = vadd.f32 %v504, %v570
    %s573 = sld [smem:[#allocation9 + $0x3e]]
    %v574 = vstv %s573
    %v575 = vmul.f32 %v574, %v94
    %v576 = vmul.f32 %v574, %v95
    %v577 = vadd.f32 %v509, %v575
    %v578 = vadd.f32 %v510, %v576
    %v579 = vsub.f32 %v99, %v101
    %v580 = vsub.f32 %v100, %v102
    %v581 = vmul.f32 %v579, 1.442695
    %v582 = vpow.pop %v581
    %v583 = vmul.f32 %v580, 1.442695
    %v584 = vpow.pop %v583
    %v585 = vadd.f32 %v517, %v582
    %v586 = vadd.f32 %v518, %v584
    %vm587 = vcmp.eq.s32.totalorder %v64, 7
    %vm588 = vcmp.eq.s32.totalorder %v65, 7
    %v589 = vsel %vm587, %v99, 0.0
    %v590 = vsel %vm588, %v100, 0.0
    %v591 = vadd.f32 %v523, %v589
    %v592 = vadd.f32 %v524, %v590
    %s593 = sld [smem:[#allocation9 + $0x3f]]
    %v594 = vstv %s593
    %v595 = vmul.f32 %v594, %v99
    %v596 = vmul.f32 %v594, %v100
    %v597 = vadd.f32 %v529, %v595
    %v598 = vadd.f32 %v530, %v596
    %s599 = sld [smem:[#allocation9 + $0x40]]
    %v600 = vstv %s599
    %v601 = vmul.f32 %v600, %v99
    %v602 = vmul.f32 %v600, %v100
    %v603 = vadd.f32 %v535, %v601
    %v604 = vadd.f32 %v536, %v602
    %s605 = sld [smem:[#allocation9 + $0x41]]
    %v606 = vstv %s605
    %v607 = vmul.f32 %v606, %v99
    %v608 = vmul.f32 %v606, %v100
    %v609 = vadd.f32 %v541, %v607
    %v610 = vadd.f32 %v542, %v608
    %s611 = sld [smem:[#allocation9 + $0x42]]
    %v612 = vstv %s611
    %v613 = vmul.f32 %v612, %v99
    %v614 = vmul.f32 %v612, %v100
    %v615 = vadd.f32 %v547, %v613
    %v616 = vadd.f32 %v548, %v614
    %s617 = sld [smem:[#allocation9 + $0x43]]
    %v618 = vstv %s617
    %v619 = vmul.f32 %v618, %v99
    %v620 = vmul.f32 %v618, %v100
    %v621 = vadd.f32 %v553, %v619
    %v622 = vadd.f32 %v554, %v620
    %s623 = sld [smem:[#allocation9 + $0x44]]
    %v624 = vstv %s623
    %v625 = vmul.f32 %v624, %v99
    %v626 = vmul.f32 %v624, %v100
    %v627 = vadd.f32 %v559, %v625
    %v628 = vadd.f32 %v560, %v626
    %s629 = sld [smem:[#allocation9 + $0x45]]
    %v630 = vstv %s629
    %v631 = vmul.f32 %v630, %v99
    %v632 = vmul.f32 %v630, %v100
    %v633 = vadd.f32 %v565, %v631
    %v634 = vadd.f32 %v566, %v632
    %s635 = sld [smem:[#allocation9 + $0x46]]
    %v636 = vstv %s635
    %v637 = vmul.f32 %v636, %v99
    %v638 = vmul.f32 %v636, %v100
    %v639 = vadd.f32 %v571, %v637
    %v640 = vadd.f32 %v572, %v638
    %s641 = sld [smem:[#allocation9 + $0x47]]
    %v642 = vstv %s641
    %v643 = vmul.f32 %v642, %v99
    %v644 = vmul.f32 %v642, %v100
    %v645 = vadd.f32 %v577, %v643
    %v646 = vadd.f32 %v578, %v644
    %v647 = vlaneseq
    %v648 = vshrl.u32 %v647, 7
    %v649 = vadd.s32 %v648, 8
    %v650 = vlaneseq
    %v651 = vand.u32 %v650, 127
    %vm652 = vcmp.ge.s32.totalorder %v648, 1
    %vm653 = vcmp.ge.s32.totalorder %v649, 1
    %vm654 = vcmp.le.s32.totalorder %v648, 14
    %vm655 = vcmp.le.s32.totalorder %v649, 14
    %vm656 = vcmp.ge.s32.totalorder %v651, 1
    %vm657 = vcmp.le.s32.totalorder %v651, 126
    %658 = vrot.lane.b32.xlu0 %v597, 1
    %v659 = vpop.permute.xlu0 %658
    %660 = vrot.lane.b32.xlu0 %v598, 1
    %v661 = vpop.permute.xlu0 %660
    %v662 = vsel %vm656, %v659, 0.0
    %v663 = vsel %vm656, %v661, 0.0
    %v664 = vadd.f32 %v662, %v603
    %v665 = vadd.f32 %v663, %v604
    %666 = vrot.lane.b32.xlu0 %v609, 127
    %v667 = vpop.permute.xlu0 %666
    %668 = vrot.lane.b32.xlu0 %v610, 127
    %v669 = vpop.permute.xlu0 %668
    %v670 = vsel %vm657, %v667, 0.0
    %v671 = vsel %vm657, %v669, 0.0
    %v672 = vadd.f32 %v664, %v670
    %v673 = vadd.f32 %v665, %v671
    %v674 = vrot.slane %v672, 7
    %v675 = vrot.slane %v673, 7
    %vm676 = vcmp.lt.s32.totalorder %v648, 1
    %v677 = vsel %vm676, %v674, %v675
    %v678 = vsel %vm676, %v675, %v674
    %v679 = vsel %vm652, %v678, 0.0
    %v680 = vsel %vm653, %v677, 0.0
    %v681 = vadd.f32 %v679, 0.0
    %v682 = vadd.f32 %v680, 0.0
    %683 = vrot.lane.b32.xlu0 %v615, 1
    %v684 = vpop.permute.xlu0 %683
    %685 = vrot.lane.b32.xlu0 %v616, 1
    %v686 = vpop.permute.xlu0 %685
    %v687 = vsel %vm656, %v684, 0.0
    %v688 = vsel %vm656, %v686, 0.0
    %v689 = vadd.f32 %v687, %v621
    %v690 = vadd.f32 %v688, %v622
    %691 = vrot.lane.b32.xlu0 %v627, 127
    %v692 = vpop.permute.xlu0 %691
    %693 = vrot.lane.b32.xlu0 %v628, 127
    %v694 = vpop.permute.xlu0 %693
    %v695 = vsel %vm657, %v692, 0.0
    %v696 = vsel %vm657, %v694, 0.0
    %v697 = vadd.f32 %v689, %v695
    %v698 = vadd.f32 %v690, %v696
    %v699 = vadd.f32 %v681, %v697
    %v700 = vadd.f32 %v682, %v698
    %701 = vrot.lane.b32.xlu0 %v633, 1
    %v702 = vpop.permute.xlu0 %701
    %703 = vrot.lane.b32.xlu0 %v634, 1
    %v704 = vpop.permute.xlu0 %703
    %v705 = vsel %vm656, %v702, 0.0
    %v706 = vsel %vm656, %v704, 0.0
    %v707 = vadd.f32 %v705, %v639
    %v708 = vadd.f32 %v706, %v640
    %709 = vrot.lane.b32.xlu0 %v645, 127
    %v710 = vpop.permute.xlu0 %709
    %711 = vrot.lane.b32.xlu0 %v646, 127
    %v712 = vpop.permute.xlu0 %711
    %v713 = vsel %vm657, %v710, 0.0
    %v714 = vsel %vm657, %v712, 0.0
    %v715 = vadd.f32 %v707, %v713
    %v716 = vadd.f32 %v708, %v714
    %v717 = vrot.slane %v715, 1
    %v718 = vrot.slane %v716, 1
    %vm719 = vcmp.lt.s32.totalorder %v648, 7
    %v720 = vsel %vm719, %v717, %v718
    %v721 = vsel %vm719, %v718, %v717
    %v722 = vsel %vm654, %v720, 0.0
    %v723 = vsel %vm655, %v721, 0.0
    %v724 = vadd.f32 %v699, %v722
    %v725 = vadd.f32 %v700, %v723
    %v726 = vlog2.pop %v585
    %v727 = vmul.f32 %v726, 0.6931472
    %v728 = vlog2.pop %v586
    %v729 = vmul.f32 %v728, 0.6931472
    %v730 = vadd.f32 %v101, %v727
    %v731 = vadd.f32 %v102, %v729
    %s732 = sld [smem:[#allocation2]]
    %v733 = vstv %s732
    %v734 = vadd.f32 %v724, %v733
    %v735 = vadd.f32 %v725, %v733
    %v736 = vsub.f32 %v734, %v62
    %v737 = vsub.f32 %v735, %v63
    %v738 = vsub.f32 %v730, %v591
    %v739 = vsub.f32 %v731, %v592
    %v740 = vmul.f32 %v736, 0.1
    %v741 = vmul.f32 %v737, 0.1
    %v742 = vmul.f32 %v740, %v736
    %v743 = vmul.f32 %v741, %v737
    %v744 = vadd.f32 %v738, %v742
    %v745 = vadd.f32 %v739, %v743
    %v746 = vadd.f32 %v744, %v745
    %747 = vadd.xlane.f32.xlu0 %v746
    %v748 = vpop.xlane.xlu0 %747
    %v749 = vrot.slane %v748, 4
    %v750 = vadd.f32 %v748, %v749
    %v751 = vrot.slane %v750, 2
    %v752 = vadd.f32 %v750, %v751
    %v753 = vrot.slane %v752, 1
    %v754 = vadd.f32 %v752, %v753
    %s755 = vtos %v754
    %s756 = smul.f32 %s755, 0.00048828125
    %s757 = scalar_lea.smem [#allocation10], 0
    %758 = sst [smem:[%s757]] %s756
    // Predicated region
    $region30: #{tpu_custom_call.1} parent=1 // pred_check
      _
    $region31: #{tpu_custom_call.1} parent=1 // pred_check_branch
      %760 = sbr.rel (0) target = $region33
    $region32: #{tpu_custom_call.1} parent=1 // pred_region
      %s762 = ssub.s32 16, 16
      %763 = vsyncadd [#allocation5], %s762
      %766 = dma.smem_to_hbm [#allocation10], 16, %s4, [#allocation5]
    $region33: #{tpu_custom_call.1} parent=1 // pred_fallthru
      _
    // Predicated region
    $region34: #{tpu_custom_call.1} parent=1 // pred_check
      _
    $region35: #{tpu_custom_call.1} parent=1 // pred_check_branch
      %768 = sbr.rel (0) target = $region37
    $region36: #{tpu_custom_call.1} parent=1 // pred_region
      %769 = dma.done [#allocation5], 16
    $region37: #{tpu_custom_call.1} parent=1 // pred_fallthru
      _
    %770 = sfence
    %771 = vsyncpa [#allocation4], 1
    %772 = vsyncpa [#allocation8], 1
    %773 = vsyncpa [#allocation5], 1
    %774 = vsyncpa [#allocation6], 1

</llo_original>
